<compile_context>
chip_gen: v7x
topology: tpu7x:2x2x1
jax: 0.10.0
libtpu: 0.0.40
codegen_flags: <defaults>
</compile_context>

<pallas_src>
import jax
import jax.numpy as jnp
from jax.experimental import pallas as pl
from jax.experimental.pallas import tpu as pltpu


def _round_up(x, m):
    return (x + m - 1) // m * m


def _mlp_kernel(x_ref, w1_ref, b1_ref, w2_ref, b2_ref, o_ref, h_ref):
    """One tile of rows: fc1 -> exact GELU -> fc2.  Dropout(p=0) is identity."""
    # fc1: MXU in the weight dtype (bf16 by default), f32 accumulation.
    h = jnp.dot(x_ref[...].astype(w1_ref.dtype), w1_ref[...],
                preferred_element_type=jnp.float32)
    h = h + b1_ref[...]  # f32 bias

    # Exact (erf-based) GELU in f32, matching torch.nn.GELU() default.
    h = 0.5 * h * (1.0 + jax.lax.erf(h * jnp.float32(0.7071067811865476)))

    # TODO(synk): Dropout with p > 0 (training mode) not implemented; p = 0.0 here.

    # Stage the intermediate in the matmul dtype (halves scratch VMEM and the
    # store/load traffic vs f32 -- the cast would happen before fc2 anyway).
    h_ref[...] = h.astype(h_ref.dtype)

    # TODO(synk): for ViT-Large/Huge H (>= 4096) split fc1 over H chunks so the
    # f32 dot-result temporary stays bounded on v7x's 64 MiB VMEM.

    # fc2: same-dtype operands, f32 accumulation.
    y = jnp.dot(h_ref[...], w2_ref[...], preferred_element_type=jnp.float32)
    y = y + b2_ref[...]
    o_ref[...] = y.astype(o_ref.dtype)


def _vmem_cap_bytes():
    """Per-generation VMEM cap with headroom for Mosaic's own allocations."""
    cap = 64 << 20
    try:
        cap = int(pltpu.get_tpu_info().vmem_capacity_bytes)
    except Exception:
        pass
    # v7x (64 MiB) -> ~52 MiB, v5e/v6e (128 MiB) -> ~104 MiB.
    return int(min(cap - (8 << 20), (cap * 13) // 16))


def _build_call(rows, tile, Din_p, H_p, Dout_p, x_dtype, compute_dtype,
                vmem_limit, cost, single_buffer_weights):
    wkw = {"pipeline_mode": pl.Buffered(1)} if single_buffer_weights else {}
    grid = (pl.cdiv(rows, tile),)
    return pl.pallas_call(
        _mlp_kernel,
        out_shape=jax.ShapeDtypeStruct((rows, Dout_p), x_dtype),
        grid_spec=pltpu.PrefetchScalarGridSpec(
            num_scalar_prefetch=0,
            grid=grid,
            in_specs=[
                # Activation rows are tiled; weights/biases are full, resident blocks.
                pl.BlockSpec((tile, Din_p), lambda i: (i, 0)),
                pl.BlockSpec((Din_p, H_p), lambda i: (0, 0), **wkw),
                pl.BlockSpec((1, H_p), lambda i: (0, 0), **wkw),
                pl.BlockSpec((H_p, Dout_p), lambda i: (0, 0), **wkw),
                pl.BlockSpec((1, Dout_p), lambda i: (0, 0), **wkw),
            ],
            out_specs=pl.BlockSpec((tile, Dout_p), lambda i: (i, 0)),
            scratch_shapes=[pltpu.VMEM((tile, H_p), compute_dtype)],
        ),
        compiler_params=pltpu.CompilerParams(
            dimension_semantics=("parallel",),
            vmem_limit_bytes=int(vmem_limit),
        ),
        cost_estimate=cost,
    )


def mlp_pallas(x, w1, b1, w2, b2, *, row_tile=None, matmul_dtype=jnp.bfloat16):
    """
    x  : (B, S, Din)
    w1 : (Din, H)   b1 : (H,)      (weights stored pre-transposed)
    w2 : (H, Dout)  b2 : (Dout,)
    returns (B, S, Dout)
    matmul_dtype : dtype for the MXU operands (default bf16); None -> native.
    """
    B, S, Din = x.shape
    Din_w, H = w1.shape
    H2, Dout = w2.shape
    assert Din_w == Din and H2 == H

    rows = B * S
    compute_dtype = (jnp.dtype(matmul_dtype) if matmul_dtype is not None
                     else jnp.dtype(w1.dtype))

    # Lane-dense feature dims: pad only when not already 128-aligned.
    Din_p = _round_up(Din, 128)
    H_p = _round_up(H, 128)
    Dout_p = _round_up(Dout, 128)

    # Row tile: multiple of 8; rows stay ragged (no row padding of x / output).
    if row_tile is None:
        row_tile = 512 if rows >= 512 else 256
    row_tile = _round_up(max(row_tile, 8), 8)
    tile = min(row_tile, _round_up(rows, 8))

    cap = _vmem_cap_bytes()
    x_isz = jnp.dtype(x.dtype).itemsize
    c_isz = compute_dtype.itemsize
    w_bytes = (Din_p * H_p + H_p * Dout_p) * c_isz + (H_p + Dout_p) * 4

    def vmem_need(t):
        act_bytes = 2 * t * (Din_p + Dout_p) * x_isz      # double-buffered tiles
        h_bytes = t * H_p * c_isz                          # scratch
        tmp_bytes = t * (H_p + Dout_p) * 4                 # f32 dot-result temps
        return w_bytes + act_bytes + h_bytes + tmp_bytes + (4 << 20)

    while tile > 256 and vmem_need(tile) > cap:
        tile //= 2
    vmem_limit = min(max(vmem_need(tile), 32 << 20), cap)

    # Pre-pad / pre-cast the (small) weights once; keep biases in f32 so the
    # bias add stays exact.
    w1p = w1.astype(compute_dtype)
    w2p = w2.astype(compute_dtype)
    if (Din_p, H_p) != (Din, H):
        w1p = jnp.pad(w1p, ((0, Din_p - Din), (0, H_p - H)))
    if (H_p, Dout_p) != (H, Dout):
        w2p = jnp.pad(w2p, ((0, H_p - H), (0, Dout_p - Dout)))
    b1p = jnp.pad(b1.astype(jnp.float32), (0, H_p - H)).reshape(1, H_p)
    b2p = jnp.pad(b2.astype(jnp.float32), (0, Dout_p - Dout)).reshape(1, Dout_p)

    # Activations: only pad the feature dim when needed (free reshape otherwise).
    x2 = x.reshape(rows, Din)
    if Din_p != Din:
        x2 = jnp.pad(x2, ((0, 0), (0, Din_p - Din)))

    cost = pl.CostEstimate(
        flops=2 * rows * (Din_p * H_p + H_p * Dout_p),
        transcendentals=rows * H_p,
        bytes_accessed=rows * (Din_p + Dout_p) * x_isz
        + (Din_p * H_p + H_p * Dout_p) * c_isz + (H_p + Dout_p) * 4,
    )

    try:
        call = _build_call(rows, tile, Din_p, H_p, Dout_p, x.dtype,
                           compute_dtype, vmem_limit, cost,
                           single_buffer_weights=True)
        out2 = call(x2, w1p, b1p, w2p, b2p)
    except Exception:
        # pl.Buffered(1) rejected by this build: fall back to the default
        # double-buffered weight blocks (budget 2x the weights).
        vmem_limit_fb = min(vmem_limit + w_bytes, cap)
        call = _build_call(rows, tile, Din_p, H_p, Dout_p, x.dtype,
                           compute_dtype, vmem_limit_fb, cost,
                           single_buffer_weights=False)
        out2 = call(x2, w1p, b1p, w2p, b2p)

    if Dout_p != Dout:
        out2 = out2[:, :Dout]
    return out2.reshape(B, S, Dout)


def _reference(x, w1, b1, w2, b2):
    h = jnp.einsum("bsd,dh->bsh", x, w1) + b1
    h = 0.5 * h * (1.0 + jax.lax.erf(h * jnp.float32(0.7071067811865476)))
    return jnp.einsum("bsh,ho->bso", h, w2) + b2


def _make_params(key, din, dh, dout):
    k_w1, k_b1, k_w2, k_b2 = jax.random.split(key, 4)
    lim1 = 1.0 / jnp.sqrt(jnp.float32(din))
    lim2 = 1.0 / jnp.sqrt(jnp.float32(dh))
    # stored pre-transposed: (in_features, hidden), (hidden, out)
    w1 = jax.random.uniform(k_w1, (din, dh), jnp.float32, -lim1, lim1)
    b1 = jax.random.uniform(k_b1, (dh,), jnp.float32, -lim1, lim1)
    w2 = jax.random.uniform(k_w2, (dh, dout), jnp.float32, -lim2, lim2)
    b2 = jax.random.uniform(k_b2, (dout,), jnp.float32, -lim2, lim2)
    return w1, b1, w2, b2


if __name__ == "__main__":
    # Shapes consistent with the module's forward:
    # (n_samples, n_patches + 1, in_features) -> (n_samples, n_patches + 1, out_features)
    key = jax.random.PRNGKey(0)
    k1, k2, k3, k4 = jax.random.split(key, 4)

    # --- Test 1: tiny unaligned dims (exercises the feature-padding path) ---
    B, S, din, dh, dout = 2, 9, 32, 64, 32
    x = jax.random.normal(k1, (B, S, din), dtype=jnp.float32)
    w1, b1, w2, b2 = _make_params(k2, din, dh, dout)
    y_ref = _reference(x, w1, b1, w2, b2)

    # Exact f32 matmul path (tight tolerance).
    y_exact = jax.block_until_ready(mlp_pallas(x, w1, b1, w2, b2, matmul_dtype=None))
    assert y_exact.shape == (B, S, dout)
    assert jnp.allclose(y_exact, y_ref, atol=1e-5, rtol=1e-5), "f32 path mismatch"

    # Default bf16-MXU path (looser tolerance from bf16 operand rounding).
    y_bf16 = jax.block_until_ready(mlp_pallas(x, w1, b1, w2, b2))
    assert jnp.allclose(y_bf16, y_ref, atol=3e-2, rtol=3e-2), "bf16 path mismatch"

    # --- Test 2: 128-aligned dims + ragged rows (no-pad fast path) ---
    B2, S2, din2, dh2, dout2 = 2, 9, 128, 256, 128
    x2 = jax.random.normal(k3, (B2, S2, din2), dtype=jnp.float32)
    w1b, b1b, w2b, b2b = _make_params(k4, din2, dh2, dout2)
    y2 = jax.block_until_ready(mlp_pallas(x2, w1b, b1b, w2b, b2b))
    y2_ref = _reference(x2, w1b, b1b, w2b, b2b)
    assert y2.shape == (B2, S2, dout2)
    assert jnp.allclose(y2, y2_ref, atol=3e-2, rtol=3e-2), "aligned path mismatch"

    print("KERNEL_OK")
</pallas_src>

<mosaic_0001>
module attributes {stable_mosaic.version = 11 : i64} {
  func.func @_mlp_kernel(%arg0: i32, %arg1: memref<24x128xf32, #tpu.memory_space<vmem>>, %arg2: memref<128x128xf32, #tpu.memory_space<vmem>>, %arg3: memref<1x128xf32, #tpu.memory_space<vmem>>, %arg4: memref<128x128xf32, #tpu.memory_space<vmem>>, %arg5: memref<1x128xf32, #tpu.memory_space<vmem>>, %arg6: memref<24x128xf32, #tpu.memory_space<vmem>>, %arg7: memref<24x128xf32, #tpu.memory_space<vmem>>) attributes {dimension_semantics = [#tpu.dimension_semantics<parallel>], iteration_bounds = array<i64: 1>, scalar_prefetch = 0 : i64, scratch_operands = 1 : i64, tpu.core_type = #tpu.core_type<tc>, window_params = [{transform_indices = @transform_0, window_bounds = array<i64: 24, 128>}, {pipeline_mode = #tpu.pipeline_mode<synchronous>, transform_indices = @transform_1, window_bounds = array<i64: 128, 128>}, {pipeline_mode = #tpu.pipeline_mode<synchronous>, transform_indices = @transform_2, window_bounds = array<i64: 1, 128>}, {pipeline_mode = #tpu.pipeline_mode<synchronous>, transform_indices = @transform_3, window_bounds = array<i64: 128, 128>}, {pipeline_mode = #tpu.pipeline_mode<synchronous>, transform_indices = @transform_4, window_bounds = array<i64: 1, 128>}, {transform_indices = @transform_5, window_bounds = array<i64: 24, 128>}]} {
    %c0 = arith.constant 0 : index
    %c0_0 = arith.constant 0 : index
    %0 = vector.load %arg1[%c0, %c0_0] : memref<24x128xf32, #tpu.memory_space<vmem>>, vector<24x128xf32>
    %c0_1 = arith.constant 0 : index
    %c0_2 = arith.constant 0 : index
    %1 = vector.load %arg2[%c0_1, %c0_2] : memref<128x128xf32, #tpu.memory_space<vmem>>, vector<128x128xf32>
    %cst = arith.constant dense<0.000000e+00> : vector<24x128xf32>
    %2 = tpu.matmul %0, %1, %cst {dimension_numbers = #tpu.dot_dimension_numbers<[1], [0], [0], [1], [0, 0, 1, 1], [], []>} : vector<24x128xf32>, vector<128x128xf32>, vector<24x128xf32> -> vector<24x128xf32>
    %c0_3 = arith.constant 0 : index
    %c0_4 = arith.constant 0 : index
    %3 = vector.load %arg3[%c0_3, %c0_4] : memref<1x128xf32, #tpu.memory_space<vmem>>, vector<1x128xf32>
    %4 = vector.broadcast %3 : vector<1x128xf32> to vector<24x128xf32>
    %5 = arith.addf %2, %4 : vector<24x128xf32>
    %cst_5 = arith.constant 5.000000e-01 : f32
    %6 = vector.broadcast %cst_5 : f32 to vector<24x128xf32>
    %7 = arith.mulf %6, %5 : vector<24x128xf32>
    %cst_6 = arith.constant 0.707106769 : f32
    %8 = vector.broadcast %cst_6 : f32 to vector<24x128xf32>
    %9 = arith.mulf %5, %8 : vector<24x128xf32>
    %10 = math.erf %9 : vector<24x128xf32>
    %cst_7 = arith.constant 1.000000e+00 : f32
    %11 = vector.broadcast %cst_7 : f32 to vector<24x128xf32>
    %12 = arith.addf %11, %10 : vector<24x128xf32>
    %13 = arith.mulf %7, %12 : vector<24x128xf32>
    %c0_8 = arith.constant 0 : index
    %c0_9 = arith.constant 0 : index
    %14 = vector.load %arg7[%c0_8, %c0_9] : memref<24x128xf32, #tpu.memory_space<vmem>>, vector<24x128xf32>
    tpu.vector_store %arg7[%c0_8, %c0_9], %13 {strides = array<i32>} : memref<24x128xf32, #tpu.memory_space<vmem>>, vector<24x128xf32>,
    %c0_10 = arith.constant 0 : index
    %c0_11 = arith.constant 0 : index
    %15 = vector.load %arg7[%c0_10, %c0_11] : memref<24x128xf32, #tpu.memory_space<vmem>>, vector<24x128xf32>
    %c0_12 = arith.constant 0 : index
    %c0_13 = arith.constant 0 : index
    %16 = vector.load %arg4[%c0_12, %c0_13] : memref<128x128xf32, #tpu.memory_space<vmem>>, vector<128x128xf32>
    %cst_14 = arith.constant dense<0.000000e+00> : vector<24x128xf32>
    %17 = tpu.matmul %15, %16, %cst_14 {dimension_numbers = #tpu.dot_dimension_numbers<[1], [0], [0], [1], [0, 0, 1, 1], [], []>} : vector<24x128xf32>, vector<128x128xf32>, vector<24x128xf32> -> vector<24x128xf32>
    %c0_15 = arith.constant 0 : index
    %c0_16 = arith.constant 0 : index
    %18 = vector.load %arg5[%c0_15, %c0_16] : memref<1x128xf32, #tpu.memory_space<vmem>>, vector<1x128xf32>
    %19 = vector.broadcast %18 : vector<1x128xf32> to vector<24x128xf32>
    %20 = arith.addf %17, %19 : vector<24x128xf32>
    %c0_17 = arith.constant 0 : index
    %c0_18 = arith.constant 0 : index
    %21 = vector.load %arg6[%c0_17, %c0_18] : memref<24x128xf32, #tpu.memory_space<vmem>>, vector<24x128xf32>
    tpu.vector_store %arg6[%c0_17, %c0_18], %20 {strides = array<i32>} : memref<24x128xf32, #tpu.memory_space<vmem>>, vector<24x128xf32>,
    return
  }
  func.func @transform_0(%arg0: i32) -> (i32, i32) {
    %c0_i32 = arith.constant 0 : i32
    %c0_i32_0 = arith.constant 0 : i32
    return %arg0, %c0_i32 : i32, i32
  }
  func.func @transform_1(%arg0: i32) -> (i32, i32) {
    %c0_i32 = arith.constant 0 : i32
    %c0_i32_0 = arith.constant 0 : i32
    %c0_i32_1 = arith.constant 0 : i32
    return %c0_i32, %c0_i32_0 : i32, i32
  }
  func.func @transform_2(%arg0: i32) -> (i32, i32) {
    %c0_i32 = arith.constant 0 : i32
    %c0_i32_0 = arith.constant 0 : i32
    %c0_i32_1 = arith.constant 0 : i32
    return %c0_i32, %c0_i32_0 : i32, i32
  }
  func.func @transform_3(%arg0: i32) -> (i32, i32) {
    %c0_i32 = arith.constant 0 : i32
    %c0_i32_0 = arith.constant 0 : i32
    %c0_i32_1 = arith.constant 0 : i32
    return %c0_i32, %c0_i32_0 : i32, i32
  }
  func.func @transform_4(%arg0: i32) -> (i32, i32) {
    %c0_i32 = arith.constant 0 : i32
    %c0_i32_0 = arith.constant 0 : i32
    %c0_i32_1 = arith.constant 0 : i32
    return %c0_i32, %c0_i32_0 : i32, i32
  }
  func.func @transform_5(%arg0: i32) -> (i32, i32) {
    %c0_i32 = arith.constant 0 : i32
    %c0_i32_0 = arith.constant 0 : i32
    return %arg0, %c0_i32 : i32, i32
  }
}

module attributes {stable_mosaic.version = 11 : i64} {
  func.func @_mlp_kernel(%arg0: i32, %arg1: memref<24x128xf32, #tpu.memory_space<vmem>>, %arg2: memref<128x128xf32, #tpu.memory_space<vmem>>, %arg3: memref<1x128xf32, #tpu.memory_space<vmem>>, %arg4: memref<128x128xf32, #tpu.memory_space<vmem>>, %arg5: memref<1x128xf32, #tpu.memory_space<vmem>>, %arg6: memref<24x128xf32, #tpu.memory_space<vmem>>, %arg7: memref<24x128xf32, #tpu.memory_space<vmem>>) attributes {dimension_semantics = [#tpu.dimension_semantics<parallel>], iteration_bounds = array<i64: 1>, scalar_prefetch = 0 : i64, scratch_operands = 1 : i64, tpu.core_type = #tpu.core_type<tc>, window_params = [{transform_indices = @transform_0, window_bounds = array<i64: 24, 128>}, {pipeline_mode = #tpu.pipeline_mode<synchronous>, transform_indices = @transform_1, window_bounds = array<i64: 128, 128>}, {pipeline_mode = #tpu.pipeline_mode<synchronous>, transform_indices = @transform_2, window_bounds = array<i64: 1, 128>}, {pipeline_mode = #tpu.pipeline_mode<synchronous>, transform_indices = @transform_3, window_bounds = array<i64: 128, 128>}, {pipeline_mode = #tpu.pipeline_mode<synchronous>, transform_indices = @transform_4, window_bounds = array<i64: 1, 128>}, {transform_indices = @transform_5, window_bounds = array<i64: 24, 128>}]} {
    %c0 = arith.constant 0 : index
    %c0_0 = arith.constant 0 : index
    %0 = vector.load %arg1[%c0, %c0_0] : memref<24x128xf32, #tpu.memory_space<vmem>>, vector<24x128xf32>
    %c0_1 = arith.constant 0 : index
    %c0_2 = arith.constant 0 : index
    %1 = vector.load %arg2[%c0_1, %c0_2] : memref<128x128xf32, #tpu.memory_space<vmem>>, vector<128x128xf32>
    %cst = arith.constant dense<0.000000e+00> : vector<24x128xf32>
    %2 = tpu.matmul %0, %1, %cst {dimension_numbers = #tpu.dot_dimension_numbers<[1], [0], [0], [1], [0, 0, 1, 1], [], []>} : vector<24x128xf32>, vector<128x128xf32>, vector<24x128xf32> -> vector<24x128xf32>
    %c0_3 = arith.constant 0 : index
    %c0_4 = arith.constant 0 : index
    %3 = vector.load %arg3[%c0_3, %c0_4] : memref<1x128xf32, #tpu.memory_space<vmem>>, vector<1x128xf32>
    %4 = vector.broadcast %3 : vector<1x128xf32> to vector<24x128xf32>
    %5 = arith.addf %2, %4 : vector<24x128xf32>
    %cst_5 = arith.constant 5.000000e-01 : f32
    %6 = vector.broadcast %cst_5 : f32 to vector<24x128xf32>
    %7 = arith.mulf %6, %5 : vector<24x128xf32>
    %cst_6 = arith.constant 0.707106769 : f32
    %8 = vector.broadcast %cst_6 : f32 to vector<24x128xf32>
    %9 = arith.mulf %5, %8 : vector<24x128xf32>
    %10 = math.erf %9 : vector<24x128xf32>
    %cst_7 = arith.constant 1.000000e+00 : f32
    %11 = vector.broadcast %cst_7 : f32 to vector<24x128xf32>
    %12 = arith.addf %11, %10 : vector<24x128xf32>
    %13 = arith.mulf %7, %12 : vector<24x128xf32>
    %c0_8 = arith.constant 0 : index
    %c0_9 = arith.constant 0 : index
    %14 = vector.load %arg7[%c0_8, %c0_9] : memref<24x128xf32, #tpu.memory_space<vmem>>, vector<24x128xf32>
    tpu.vector_store %arg7[%c0_8, %c0_9], %13 {strides = array<i32>} : memref<24x128xf32, #tpu.memory_space<vmem>>, vector<24x128xf32>,
    %c0_10 = arith.constant 0 : index
    %c0_11 = arith.constant 0 : index
    %15 = vector.load %arg7[%c0_10, %c0_11] : memref<24x128xf32, #tpu.memory_space<vmem>>, vector<24x128xf32>
    %c0_12 = arith.constant 0 : index
    %c0_13 = arith.constant 0 : index
    %16 = vector.load %arg4[%c0_12, %c0_13] : memref<128x128xf32, #tpu.memory_space<vmem>>, vector<128x128xf32>
    %cst_14 = arith.constant dense<0.000000e+00> : vector<24x128xf32>
    %17 = tpu.matmul %15, %16, %cst_14 {dimension_numbers = #tpu.dot_dimension_numbers<[1], [0], [0], [1], [0, 0, 1, 1], [], []>} : vector<24x128xf32>, vector<128x128xf32>, vector<24x128xf32> -> vector<24x128xf32>
    %c0_15 = arith.constant 0 : index
    %c0_16 = arith.constant 0 : index
    %18 = vector.load %arg5[%c0_15, %c0_16] : memref<1x128xf32, #tpu.memory_space<vmem>>, vector<1x128xf32>
    %19 = vector.broadcast %18 : vector<1x128xf32> to vector<24x128xf32>
    %20 = arith.addf %17, %19 : vector<24x128xf32>
    %c0_17 = arith.constant 0 : index
    %c0_18 = arith.constant 0 : index
    %21 = vector.load %arg6[%c0_17, %c0_18] : memref<24x128xf32, #tpu.memory_space<vmem>>, vector<24x128xf32>
    tpu.vector_store %arg6[%c0_17, %c0_18], %20 {strides = array<i32>} : memref<24x128xf32, #tpu.memory_space<vmem>>, vector<24x128xf32>,
    return
  }
  func.func @transform_0(%arg0: i32) -> (i32, i32) {
    %c0_i32 = arith.constant 0 : i32
    %c0_i32_0 = arith.constant 0 : i32
    return %arg0, %c0_i32 : i32, i32
  }
  func.func @transform_1(%arg0: i32) -> (i32, i32) {
    %c0_i32 = arith.constant 0 : i32
    %c0_i32_0 = arith.constant 0 : i32
    %c0_i32_1 = arith.constant 0 : i32
    return %c0_i32, %c0_i32_0 : i32, i32
  }
  func.func @transform_2(%arg0: i32) -> (i32, i32) {
    %c0_i32 = arith.constant 0 : i32
    %c0_i32_0 = arith.constant 0 : i32
    %c0_i32_1 = arith.constant 0 : i32
    return %c0_i32, %c0_i32_0 : i32, i32
  }
  func.func @transform_3(%arg0: i32) -> (i32, i32) {
    %c0_i32 = arith.constant 0 : i32
    %c0_i32_0 = arith.constant 0 : i32
    %c0_i32_1 = arith.constant 0 : i32
    return %c0_i32, %c0_i32_0 : i32, i32
  }
  func.func @transform_4(%arg0: i32) -> (i32, i32) {
    %c0_i32 = arith.constant 0 : i32
    %c0_i32_0 = arith.constant 0 : i32
    %c0_i32_1 = arith.constant 0 : i32
    return %c0_i32, %c0_i32_0 : i32, i32
  }
  func.func @transform_5(%arg0: i32) -> (i32, i32) {
    %c0_i32 = arith.constant 0 : i32
    %c0_i32_0 = arith.constant 0 : i32
    return %arg0, %c0_i32 : i32, i32
  }
}

</mosaic_0001>

<llo_original>
// kernel: tpu_custom_call.1
$region0: #{tpu_custom_call.1}
  #allocation0 [shape = 'u32[]', space=smem, size = 0x4, offset = 0x4, fixed_abs, tag = 'smem constant byte address 0x4 - core index']
  #allocation1 [shape = 'u32[144,128]{1,0:T(1,128)}', space=vmem, size = 0x12000, scoped, tag = 'internal scratch']
  #allocation2 [shape = 'f32[24,128]{1,0:T(8,128)}', space=vmem, size = 0x3000, scoped, tag = 'scratch operand']
  %s0 = inlined_call_operand.hbm [shape: f32[18,128], index: 0, kind: input, shape index: {}]
  %s1 = inlined_call_operand.hbm [shape: f32[128,128], index: 1, kind: input, shape index: {}]
  %s2 = inlined_call_operand.vmem [shape: f32[1,128], index: 2, kind: input, shape index: {}]
  %s3 = inlined_call_operand.hbm [shape: f32[128,128], index: 3, kind: input, shape index: {}]
  %s4 = inlined_call_operand.vmem [shape: f32[1,128], index: 4, kind: input, shape index: {}]
  %s5 = inlined_call_operand.hbm [shape: f32[18,128], index: 5, kind: output, shape index: {}]
  %s6 = sld [smem:[#allocation0]]
  $region42: #{tpu_custom_call.1} parent=0
    _
  %s8 = ssub.s32 1, %s6
  %s9 = scalar_select 0, %s8, %s6
  $region1: #{tpu_custom_call.1} parent=0
    #allocation3 [shape = 'u8[12288]{0}', space=vmem, size = 0x3000, scoped, tag = 'input window, operand 0, single buffered']
    #allocation4 [shape = 's32[1]{0}', space=sflag, size = 0x4, scoped, tag = 'scoped memory for tpu_custom_call.1']
    #allocation5 [shape = 's32[1]{0}', space=sflag, size = 0x4, scoped, tag = 'scoped memory for tpu_custom_call.1']
    #allocation6 [shape = 'u8[65536]{0}', space=vmem, size = 0x10000, scoped, tag = 'input window, operand 1, single buffered']
    #allocation7 [shape = 's32[1]{0}', space=sflag, size = 0x4, scoped, tag = 'scoped memory for tpu_custom_call.1']
    #allocation8 [shape = 'u8[65536]{0}', space=vmem, size = 0x10000, scoped, tag = 'input window, operand 3, single buffered']
    #allocation9 [shape = 'u8[12288]{0}', space=vmem, size = 0x3000, scoped, tag = 'output window, operand 0, single buffered']
    %10 = vsyncpa [#allocation4], 0
    %11 = vsyncpa [#allocation7], 0
    %12 = vsyncpa [#allocation5], 0
    // Predicated region
    $region2: #{tpu_custom_call.1} parent=1 // pred_check
      _
    $region3: #{tpu_custom_call.1} parent=1 // pred_check_branch
      %14 = sbr.rel (0) target = $region5
    $region4: #{tpu_custom_call.1} parent=1 // pred_region
      %s16 = ssub.s32 384, 384
      %17 = vsyncadd [#allocation4], %s16
      %s18 = sshll.u32 [#allocation3], 4
      %s19 = int_to_ptr.vmem [resolvable:$true] %s18
      %24 = dma.hbm_to_vmem [thread:$0]  %s0, 384, %s19, [#allocation4], 128, 128, 8
    $region5: #{tpu_custom_call.1} parent=1 // pred_fallthru
      _
    // Predicated region
    $region6: #{tpu_custom_call.1} parent=1 // pred_check
      _
    $region7: #{tpu_custom_call.1} parent=1 // pred_check_branch
      %26 = sbr.rel (0) target = $region9
    $region8: #{tpu_custom_call.1} parent=1 // pred_region
      %s28 = ssub.s32 2048, 2048
      %29 = vsyncadd [#allocation7], %s28
      %s30 = sshll.u32 [#allocation6], 4
      %s31 = int_to_ptr.vmem [resolvable:$true] %s30
      %36 = dma.hbm_to_vmem [thread:$0]  %s1, 2048, %s31, [#allocation7], 128, 128, 8
    $region9: #{tpu_custom_call.1} parent=1 // pred_fallthru
      _
    // Predicated region
    $region10: #{tpu_custom_call.1} parent=1 // pred_check
      _
    $region11: #{tpu_custom_call.1} parent=1 // pred_check_branch
      %38 = sbr.rel (0) target = $region13
    $region12: #{tpu_custom_call.1} parent=1 // pred_region
      _
    $region13: #{tpu_custom_call.1} parent=1 // pred_fallthru
      _
    // Predicated region
    $region14: #{tpu_custom_call.1} parent=1 // pred_check
      _
    $region15: #{tpu_custom_call.1} parent=1 // pred_check_branch
      %40 = sbr.rel (0) target = $region17
    $region16: #{tpu_custom_call.1} parent=1 // pred_region
      %s42 = ssub.s32 2048, 2048
      %43 = vsyncadd [#allocation7], %s42
      %s44 = sshll.u32 [#allocation8], 4
      %s45 = int_to_ptr.vmem [resolvable:$true] %s44
      %50 = dma.hbm_to_vmem [thread:$0]  %s3, 2048, %s45, [#allocation7], 128, 128, 8
    $region17: #{tpu_custom_call.1} parent=1 // pred_fallthru
      _
    // Predicated region
    $region18: #{tpu_custom_call.1} parent=1 // pred_check
      _
    $region19: #{tpu_custom_call.1} parent=1 // pred_check_branch
      %52 = sbr.rel (0) target = $region21
    $region20: #{tpu_custom_call.1} parent=1 // pred_region
      _
    $region21: #{tpu_custom_call.1} parent=1 // pred_fallthru
      _
    // Predicated region
    $region22: #{tpu_custom_call.1} parent=1 // pred_check
      _
    $region23: #{tpu_custom_call.1} parent=1 // pred_check_branch
      %54 = sbr.rel (0) target = $region25
    $region24: #{tpu_custom_call.1} parent=1 // pred_region
      %55 = dma.done [#allocation4], 384
    $region25: #{tpu_custom_call.1} parent=1 // pred_fallthru
      _
    // Predicated region
    $region26: #{tpu_custom_call.1} parent=1 // pred_check
      _
    $region27: #{tpu_custom_call.1} parent=1 // pred_check_branch
      %57 = sbr.rel (0) target = $region29
    $region28: #{tpu_custom_call.1} parent=1 // pred_region
      %58 = dma.done [#allocation7], 2048
    $region29: #{tpu_custom_call.1} parent=1 // pred_fallthru
      _
    // Predicated region
    $region30: #{tpu_custom_call.1} parent=1 // pred_check
      _
    $region31: #{tpu_custom_call.1} parent=1 // pred_check_branch
      %60 = sbr.rel (0) target = $region33
    $region32: #{tpu_custom_call.1} parent=1 // pred_region
      %61 = dma.done [#allocation7], 2048
    $region33: #{tpu_custom_call.1} parent=1 // pred_fallthru
      _
    %v62 = vld [vmem:[#allocation3] sm:$0xff]
    %v63 = vld [vmem:[#allocation3 + $0x8] sm:$0xff]
    %v64 = vld [vmem:[#allocation3 + $0x10] sm:$0xff]
    %v65 = vld [vmem:[#allocation6] sm:$0xff]
    %v66 = vld [vmem:[#allocation6 + $0x8] sm:$0xff]
    %v67 = vld [vmem:[#allocation6 + $0x10] sm:$0xff]
    %v68 = vld [vmem:[#allocation6 + $0x18] sm:$0xff]
    %v69 = vld [vmem:[#allocation6 + $0x20] sm:$0xff]
    %v70 = vld [vmem:[#allocation6 + $0x28] sm:$0xff]
    %v71 = vld [vmem:[#allocation6 + $0x30] sm:$0xff]
    %v72 = vld [vmem:[#allocation6 + $0x38] sm:$0xff]
    %v73 = vld [vmem:[#allocation6 + $0x40] sm:$0xff]
    %v74 = vld [vmem:[#allocation6 + $0x48] sm:$0xff]
    %v75 = vld [vmem:[#allocation6 + $0x50] sm:$0xff]
    %v76 = vld [vmem:[#allocation6 + $0x58] sm:$0xff]
    %v77 = vld [vmem:[#allocation6 + $0x60] sm:$0xff]
    %v78 = vld [vmem:[#allocation6 + $0x68] sm:$0xff]
    %v79 = vld [vmem:[#allocation6 + $0x70] sm:$0xff]
    %v80 = vld [vmem:[#allocation6 + $0x78] sm:$0xff]
    %v81 = vld [vmem:[%s2] sm:$0x1]
    %v83 = vlaneseq
    %v84 = vshrl.u32 %v83, 7
    %v85 = vsub.s32 0, %v84
    %v86 = vrot.slane %v81, %v85
    %88 = vmatprep.subr.mxu0 0.0
    %89 = vmatpush1.msra.mxu0 %v65
    %90 = vmatprep.subr.mxu0 0.0
    %91 = vmatpush1.msra.mxu0 %v66
    %92 = vmatprep.subr.mxu0 0.0
    %93 = vmatpush1.msra.mxu0 %v67
    %94 = vmatprep.subr.mxu0 0.0
    %95 = vmatpush1.msra.mxu0 %v68
    %96 = vmatprep.subr.mxu0 0.0
    %97 = vmatpush1.msra.mxu0 %v69
    %98 = vmatprep.subr.mxu0 0.0
    %99 = vmatpush1.msra.mxu0 %v70
    %100 = vmatprep.subr.mxu0 0.0
    %101 = vmatpush1.msra.mxu0 %v71
    %102 = vmatprep.subr.mxu0 0.0
    %103 = vmatpush1.msra.mxu0 %v72
    %104 = vmatprep.subr.mxu0 0.0
    %105 = vmatpush1.msra.mxu0 %v73
    %106 = vmatprep.subr.mxu0 0.0
    %107 = vmatpush1.msra.mxu0 %v74
    %108 = vmatprep.subr.mxu0 0.0
    %109 = vmatpush1.msra.mxu0 %v75
    %110 = vmatprep.subr.mxu0 0.0
    %111 = vmatpush1.msra.mxu0 %v76
    %112 = vmatprep.subr.mxu0 0.0
    %113 = vmatpush1.msra.mxu0 %v77
    %114 = vmatprep.subr.mxu0 0.0
    %115 = vmatpush1.msra.mxu0 %v78
    %116 = vmatprep.subr.mxu0 0.0
    %117 = vmatpush1.msra.mxu0 %v79
    %118 = vmatprep.subr.mxu0 0.0
    %119 = vmatpush1.msra.mxu0 %v80
    %120 = vmatprep.subr.mxu0 0.0
    %121 = vmatpush1.msra.mxu0 0.0
    %122 = vmatprep.subr.mxu0 0.0
    %123 = vmatpush1.msra.mxu0 0.0
    %124 = vmatprep.subr.mxu0 0.0
    %125 = vmatpush1.msra.mxu0 0.0
    %126 = vmatprep.subr.mxu0 0.0
    %127 = vmatpush1.msra.mxu0 0.0
    %128 = vmatprep.subr.mxu0 0.0
    %129 = vmatpush1.msra.mxu0 0.0
    %130 = vmatprep.subr.mxu0 0.0
    %131 = vmatpush1.msra.mxu0 0.0
    %132 = vmatprep.subr.mxu0 0.0
    %133 = vmatpush1.msra.mxu0 0.0
    %134 = vmatprep.subr.mxu0 0.0
    %135 = vmatpush1.msra.mxu0 0.0
    %136 = vmatprep.subr.mxu0 0.0
    %137 = vmatpush1.msra.mxu0 0.0
    %138 = vmatprep.subr.mxu0 0.0
    %139 = vmatpush1.msra.mxu0 0.0
    %140 = vmatprep.subr.mxu0 0.0
    %141 = vmatpush1.msra.mxu0 0.0
    %142 = vmatprep.subr.mxu0 0.0
    %143 = vmatpush1.msra.mxu0 0.0
    %144 = vmatprep.subr.mxu0 0.0
    %145 = vmatpush1.msra.mxu0 0.0
    %146 = vmatprep.subr.mxu0 0.0
    %147 = vmatpush1.msra.mxu0 0.0
    %148 = vmatprep.subr.mxu0 0.0
    %149 = vmatpush1.msra.mxu0 0.0
    %150 = vmatprep.subr.mxu0 0.0
    %151 = vmatpush1.msra.mxu0 0.0
    %152 = vmatprep.mubr.f32.mxu0 0.0
    %153 = vmatmul.mubr.f32.gmra.mrb[0].mxu0 %v62
    %v154 = vpop.f32.mrb[0].mxu0
    %v155 = vadd.f32 %v86, %v154
    %v156 = vpop.f32.mrb[0].mxu0
    %157 = vmatprep.mubr.f32.mxu0 0.0
    %158 = vmatmul.mubr.f32.gmra.mrb[0].mxu0 %v63
    %v159 = vpop.f32.mrb[0].mxu0
    %v160 = vadd.f32 %v86, %v159
    %v161 = vpop.f32.mrb[0].mxu0
    %162 = vmatprep.mubr.f32.mxu0 0.0
    %163 = vmatmul.mubr.f32.gmra.mrb[0].mxu0 %v64
    %v164 = vpop.f32.mrb[0].mxu0
    %v165 = vadd.f32 %v86, %v164
    %v166 = vpop.f32.mrb[0].mxu0
    %167 = vdwg.mxu0
    %v168 = vmul.f32 %v155, 0.5
    %v169 = vmul.f32 %v160, 0.5
    %v170 = vmul.f32 %v165, 0.5
    %v171 = vmul.f32 %v155, 0.70710677
    %v172 = vmul.f32 %v160, 0.70710677
    %v173 = vmul.f32 %v165, 0.70710677
    %v174 = verf.f32.pop %v171
    %v175 = verf.f32.pop %v172
    %v176 = verf.f32.pop %v173
    %v177 = vadd.f32 %v174, 1.0
    %v178 = vadd.f32 %v175, 1.0
    %v179 = vadd.f32 %v176, 1.0
    %v180 = vmul.f32 %v168, %v177
    %v181 = vmul.f32 %v169, %v178
    %v182 = vmul.f32 %v170, %v179
    %183 = vst [vmem:[#allocation2] sm:$0xff] %v180
    %184 = vst [vmem:[#allocation2 + $0x8] sm:$0xff] %v181
    %185 = vst [vmem:[#allocation2 + $0x10] sm:$0xff] %v182
    %v186 = vld [vmem:[#allocation2] sm:$0xff]
    %v187 = vld [vmem:[#allocation2 + $0x8] sm:$0xff]
    %v188 = vld [vmem:[#allocation2 + $0x10] sm:$0xff]
    %v189 = vld [vmem:[#allocation8] sm:$0xff]
    %v190 = vld [vmem:[#allocation8 + $0x8] sm:$0xff]
    %v191 = vld [vmem:[#allocation8 + $0x10] sm:$0xff]
    %v192 = vld [vmem:[#allocation8 + $0x18] sm:$0xff]
    %v193 = vld [vmem:[#allocation8 + $0x20] sm:$0xff]
    %v194 = vld [vmem:[#allocation8 + $0x28] sm:$0xff]
    %v195 = vld [vmem:[#allocation8 + $0x30] sm:$0xff]
    %v196 = vld [vmem:[#allocation8 + $0x38] sm:$0xff]
    %v197 = vld [vmem:[#allocation8 + $0x40] sm:$0xff]
    %v198 = vld [vmem:[#allocation8 + $0x48] sm:$0xff]
    %v199 = vld [vmem:[#allocation8 + $0x50] sm:$0xff]
    %v200 = vld [vmem:[#allocation8 + $0x58] sm:$0xff]
    %v201 = vld [vmem:[#allocation8 + $0x60] sm:$0xff]
    %v202 = vld [vmem:[#allocation8 + $0x68] sm:$0xff]
    %v203 = vld [vmem:[#allocation8 + $0x70] sm:$0xff]
    %v204 = vld [vmem:[#allocation8 + $0x78] sm:$0xff]
    %v205 = vld [vmem:[%s4] sm:$0x1]
    %v207 = vlaneseq
    %v208 = vshrl.u32 %v207, 7
    %v209 = vsub.s32 0, %v208
    %v210 = vrot.slane %v205, %v209
    %212 = vmatprep.subr.mxu0 0.0
    %213 = vmatpush1.msra.mxu0 %v189
    %214 = vmatprep.subr.mxu0 0.0
    %215 = vmatpush1.msra.mxu0 %v190
    %216 = vmatprep.subr.mxu0 0.0
    %217 = vmatpush1.msra.mxu0 %v191
    %218 = vmatprep.subr.mxu0 0.0
    %219 = vmatpush1.msra.mxu0 %v192
    %220 = vmatprep.subr.mxu0 0.0
    %221 = vmatpush1.msra.mxu0 %v193
    %222 = vmatprep.subr.mxu0 0.0
    %223 = vmatpush1.msra.mxu0 %v194
    %224 = vmatprep.subr.mxu0 0.0
    %225 = vmatpush1.msra.mxu0 %v195
    %226 = vmatprep.subr.mxu0 0.0
    %227 = vmatpush1.msra.mxu0 %v196
    %228 = vmatprep.subr.mxu0 0.0
    %229 = vmatpush1.msra.mxu0 %v197
    %230 = vmatprep.subr.mxu0 0.0
    %231 = vmatpush1.msra.mxu0 %v198
    %232 = vmatprep.subr.mxu0 0.0
    %233 = vmatpush1.msra.mxu0 %v199
    %234 = vmatprep.subr.mxu0 0.0
    %235 = vmatpush1.msra.mxu0 %v200
    %236 = vmatprep.subr.mxu0 0.0
    %237 = vmatpush1.msra.mxu0 %v201
    %238 = vmatprep.subr.mxu0 0.0
    %239 = vmatpush1.msra.mxu0 %v202
    %240 = vmatprep.subr.mxu0 0.0
    %241 = vmatpush1.msra.mxu0 %v203
    %242 = vmatprep.subr.mxu0 0.0
    %243 = vmatpush1.msra.mxu0 %v204
    %244 = vmatprep.subr.mxu0 0.0
    %245 = vmatpush1.msra.mxu0 0.0
    %246 = vmatprep.subr.mxu0 0.0
    %247 = vmatpush1.msra.mxu0 0.0
    %248 = vmatprep.subr.mxu0 0.0
    %249 = vmatpush1.msra.mxu0 0.0
    %250 = vmatprep.subr.mxu0 0.0
    %251 = vmatpush1.msra.mxu0 0.0
    %252 = vmatprep.subr.mxu0 0.0
    %253 = vmatpush1.msra.mxu0 0.0
    %254 = vmatprep.subr.mxu0 0.0
    %255 = vmatpush1.msra.mxu0 0.0
    %256 = vmatprep.subr.mxu0 0.0
    %257 = vmatpush1.msra.mxu0 0.0
    %258 = vmatprep.subr.mxu0 0.0
    %259 = vmatpush1.msra.mxu0 0.0
    %260 = vmatprep.subr.mxu0 0.0
    %261 = vmatpush1.msra.mxu0 0.0
    %262 = vmatprep.subr.mxu0 0.0
    %263 = vmatpush1.msra.mxu0 0.0
    %264 = vmatprep.subr.mxu0 0.0
    %265 = vmatpush1.msra.mxu0 0.0
    %266 = vmatprep.subr.mxu0 0.0
    %267 = vmatpush1.msra.mxu0 0.0
    %268 = vmatprep.subr.mxu0 0.0
    %269 = vmatpush1.msra.mxu0 0.0
    %270 = vmatprep.subr.mxu0 0.0
    %271 = vmatpush1.msra.mxu0 0.0
    %272 = vmatprep.subr.mxu0 0.0
    %273 = vmatpush1.msra.mxu0 0.0
    %274 = vmatprep.subr.mxu0 0.0
    %275 = vmatpush1.msra.mxu0 0.0
    %276 = vmatprep.mubr.f32.mxu0 0.0
    %277 = vmatmul.mubr.f32.gmra.mrb[0].mxu0 %v186
    %v278 = vpop.f32.mrb[0].mxu0
    %v279 = vadd.f32 %v210, %v278
    %v280 = vpop.f32.mrb[0].mxu0
    %281 = vmatprep.mubr.f32.mxu0 0.0
    %282 = vmatmul.mubr.f32.gmra.mrb[0].mxu0 %v187
    %v283 = vpop.f32.mrb[0].mxu0
    %v284 = vadd.f32 %v210, %v283
    %v285 = vpop.f32.mrb[0].mxu0
    %286 = vmatprep.mubr.f32.mxu0 0.0
    %287 = vmatmul.mubr.f32.gmra.mrb[0].mxu0 %v188
    %v288 = vpop.f32.mrb[0].mxu0
    %v289 = vadd.f32 %v210, %v288
    %v290 = vpop.f32.mrb[0].mxu0
    %291 = vdwg.mxu0
    %292 = vst [vmem:[#allocation9] sm:$0xff] %v279
    %293 = vst [vmem:[#allocation9 + $0x8] sm:$0xff] %v284
    %294 = vst [vmem:[#allocation9 + $0x10] sm:$0xff] %v289
    // Predicated region
    $region34: #{tpu_custom_call.1} parent=1 // pred_check
      _
    $region35: #{tpu_custom_call.1} parent=1 // pred_check_branch
      %296 = sbr.rel (0) target = $region37
    $region36: #{tpu_custom_call.1} parent=1 // pred_region
      %s298 = ssub.s32 384, 384
      %299 = vsyncadd [#allocation5], %s298
      %s300 = sshll.u32 [#allocation9], 4
      %s301 = int_to_ptr.vmem [resolvable:$true] %s300
      %306 = dma.vmem_to_hbm [thread:$0]  %s301, 384, %s5, [#allocation5], 128, 128, 8
    $region37: #{tpu_custom_call.1} parent=1 // pred_fallthru
      _
    // Predicated region
    $region38: #{tpu_custom_call.1} parent=1 // pred_check
      _
    $region39: #{tpu_custom_call.1} parent=1 // pred_check_branch
      %308 = sbr.rel (0) target = $region41
    $region40: #{tpu_custom_call.1} parent=1 // pred_region
      %309 = dma.done [#allocation5], 384
    $region41: #{tpu_custom_call.1} parent=1 // pred_fallthru
      _
    %310 = vsyncpa [#allocation4], 1
    %311 = vsyncpa [#allocation7], 1
    %312 = vsyncpa [#allocation5], 1

// kernel: tpu_custom_call.1
$region0: #{tpu_custom_call.1}
  #allocation0 [shape = 'u32[]', space=smem, size = 0x4, offset = 0x4, fixed_abs, tag = 'smem constant byte address 0x4 - core index']
  #allocation1 [shape = 'u32[144,128]{1,0:T(1,128)}', space=vmem, size = 0x12000, scoped, tag = 'internal scratch']
  #allocation2 [shape = 'f32[24,128]{1,0:T(8,128)}', space=vmem, size = 0x3000, scoped, tag = 'scratch operand']
  %s0 = inlined_call_operand.hbm [shape: f32[18,128], index: 0, kind: input, shape index: {}]
  %s1 = inlined_call_operand.hbm [shape: f32[128,128], index: 1, kind: input, shape index: {}]
  %s2 = inlined_call_operand.vmem [shape: f32[1,128], index: 2, kind: input, shape index: {}]
  %s3 = inlined_call_operand.hbm [shape: f32[128,128], index: 3, kind: input, shape index: {}]
  %s4 = inlined_call_operand.vmem [shape: f32[1,128], index: 4, kind: input, shape index: {}]
  %s5 = inlined_call_operand.hbm [shape: f32[18,128], index: 5, kind: output, shape index: {}]
  %s6 = sld [smem:[#allocation0]]
  $region42: #{tpu_custom_call.1} parent=0
    _
  %s8 = ssub.s32 1, %s6
  %s9 = scalar_select 0, %s8, %s6
  $region1: #{tpu_custom_call.1} parent=0
    #allocation3 [shape = 'u8[12288]{0}', space=vmem, size = 0x3000, scoped, tag = 'input window, operand 0, single buffered']
    #allocation4 [shape = 's32[1]{0}', space=sflag, size = 0x4, scoped, tag = 'scoped memory for tpu_custom_call.1']
    #allocation5 [shape = 's32[1]{0}', space=sflag, size = 0x4, scoped, tag = 'scoped memory for tpu_custom_call.1']
    #allocation6 [shape = 'u8[65536]{0}', space=vmem, size = 0x10000, scoped, tag = 'input window, operand 1, single buffered']
    #allocation7 [shape = 's32[1]{0}', space=sflag, size = 0x4, scoped, tag = 'scoped memory for tpu_custom_call.1']
    #allocation8 [shape = 'u8[65536]{0}', space=vmem, size = 0x10000, scoped, tag = 'input window, operand 3, single buffered']
    #allocation9 [shape = 'u8[12288]{0}', space=vmem, size = 0x3000, scoped, tag = 'output window, operand 0, single buffered']
    %10 = vsyncpa [#allocation4], 0
    %11 = vsyncpa [#allocation7], 0
    %12 = vsyncpa [#allocation5], 0
    // Predicated region
    $region2: #{tpu_custom_call.1} parent=1 // pred_check
      _
    $region3: #{tpu_custom_call.1} parent=1 // pred_check_branch
      %14 = sbr.rel (0) target = $region5
    $region4: #{tpu_custom_call.1} parent=1 // pred_region
      %s16 = ssub.s32 384, 384
      %17 = vsyncadd [#allocation4], %s16
      %s18 = sshll.u32 [#allocation3], 4
      %s19 = int_to_ptr.vmem [resolvable:$true] %s18
      %24 = dma.hbm_to_vmem [thread:$0]  %s0, 384, %s19, [#allocation4], 128, 128, 8
    $region5: #{tpu_custom_call.1} parent=1 // pred_fallthru
      _
    // Predicated region
    $region6: #{tpu_custom_call.1} parent=1 // pred_check
      _
    $region7: #{tpu_custom_call.1} parent=1 // pred_check_branch
      %26 = sbr.rel (0) target = $region9
    $region8: #{tpu_custom_call.1} parent=1 // pred_region
      %s28 = ssub.s32 2048, 2048
      %29 = vsyncadd [#allocation7], %s28
      %s30 = sshll.u32 [#allocation6], 4
      %s31 = int_to_ptr.vmem [resolvable:$true] %s30
      %36 = dma.hbm_to_vmem [thread:$0]  %s1, 2048, %s31, [#allocation7], 128, 128, 8
    $region9: #{tpu_custom_call.1} parent=1 // pred_fallthru
      _
    // Predicated region
    $region10: #{tpu_custom_call.1} parent=1 // pred_check
      _
    $region11: #{tpu_custom_call.1} parent=1 // pred_check_branch
      %38 = sbr.rel (0) target = $region13
    $region12: #{tpu_custom_call.1} parent=1 // pred_region
      _
    $region13: #{tpu_custom_call.1} parent=1 // pred_fallthru
      _
    // Predicated region
    $region14: #{tpu_custom_call.1} parent=1 // pred_check
      _
    $region15: #{tpu_custom_call.1} parent=1 // pred_check_branch
      %40 = sbr.rel (0) target = $region17
    $region16: #{tpu_custom_call.1} parent=1 // pred_region
      %s42 = ssub.s32 2048, 2048
      %43 = vsyncadd [#allocation7], %s42
      %s44 = sshll.u32 [#allocation8], 4
      %s45 = int_to_ptr.vmem [resolvable:$true] %s44
      %50 = dma.hbm_to_vmem [thread:$0]  %s3, 2048, %s45, [#allocation7], 128, 128, 8
    $region17: #{tpu_custom_call.1} parent=1 // pred_fallthru
      _
    // Predicated region
    $region18: #{tpu_custom_call.1} parent=1 // pred_check
      _
    $region19: #{tpu_custom_call.1} parent=1 // pred_check_branch
      %52 = sbr.rel (0) target = $region21
    $region20: #{tpu_custom_call.1} parent=1 // pred_region
      _
    $region21: #{tpu_custom_call.1} parent=1 // pred_fallthru
      _
    // Predicated region
    $region22: #{tpu_custom_call.1} parent=1 // pred_check
      _
    $region23: #{tpu_custom_call.1} parent=1 // pred_check_branch
      %54 = sbr.rel (0) target = $region25
    $region24: #{tpu_custom_call.1} parent=1 // pred_region
      %55 = dma.done [#allocation4], 384
    $region25: #{tpu_custom_call.1} parent=1 // pred_fallthru
      _
    // Predicated region
    $region26: #{tpu_custom_call.1} parent=1 // pred_check
      _
    $region27: #{tpu_custom_call.1} parent=1 // pred_check_branch
      %57 = sbr.rel (0) target = $region29
    $region28: #{tpu_custom_call.1} parent=1 // pred_region
      %58 = dma.done [#allocation7], 2048
    $region29: #{tpu_custom_call.1} parent=1 // pred_fallthru
      _
    // Predicated region
    $region30: #{tpu_custom_call.1} parent=1 // pred_check
      _
    $region31: #{tpu_custom_call.1} parent=1 // pred_check_branch
      %60 = sbr.rel (0) target = $region33
    $region32: #{tpu_custom_call.1} parent=1 // pred_region
      %61 = dma.done [#allocation7], 2048
    $region33: #{tpu_custom_call.1} parent=1 // pred_fallthru
      _
    %v62 = vld [vmem:[#allocation3] sm:$0xff]
    %v63 = vld [vmem:[#allocation3 + $0x8] sm:$0xff]
    %v64 = vld [vmem:[#allocation3 + $0x10] sm:$0xff]
    %v65 = vld [vmem:[#allocation6] sm:$0xff]
    %v66 = vld [vmem:[#allocation6 + $0x8] sm:$0xff]
    %v67 = vld [vmem:[#allocation6 + $0x10] sm:$0xff]
    %v68 = vld [vmem:[#allocation6 + $0x18] sm:$0xff]
    %v69 = vld [vmem:[#allocation6 + $0x20] sm:$0xff]
    %v70 = vld [vmem:[#allocation6 + $0x28] sm:$0xff]
    %v71 = vld [vmem:[#allocation6 + $0x30] sm:$0xff]
    %v72 = vld [vmem:[#allocation6 + $0x38] sm:$0xff]
    %v73 = vld [vmem:[#allocation6 + $0x40] sm:$0xff]
    %v74 = vld [vmem:[#allocation6 + $0x48] sm:$0xff]
    %v75 = vld [vmem:[#allocation6 + $0x50] sm:$0xff]
    %v76 = vld [vmem:[#allocation6 + $0x58] sm:$0xff]
    %v77 = vld [vmem:[#allocation6 + $0x60] sm:$0xff]
    %v78 = vld [vmem:[#allocation6 + $0x68] sm:$0xff]
    %v79 = vld [vmem:[#allocation6 + $0x70] sm:$0xff]
    %v80 = vld [vmem:[#allocation6 + $0x78] sm:$0xff]
    %v81 = vld [vmem:[%s2] sm:$0x1]
    %v83 = vlaneseq
    %v84 = vshrl.u32 %v83, 7
    %v85 = vsub.s32 0, %v84
    %v86 = vrot.slane %v81, %v85
    %88 = vmatprep.subr.mxu0 0.0
    %89 = vmatpush1.msra.mxu0 %v65
    %90 = vmatprep.subr.mxu0 0.0
    %91 = vmatpush1.msra.mxu0 %v66
    %92 = vmatprep.subr.mxu0 0.0
    %93 = vmatpush1.msra.mxu0 %v67
    %94 = vmatprep.subr.mxu0 0.0
    %95 = vmatpush1.msra.mxu0 %v68
    %96 = vmatprep.subr.mxu0 0.0
    %97 = vmatpush1.msra.mxu0 %v69
    %98 = vmatprep.subr.mxu0 0.0
    %99 = vmatpush1.msra.mxu0 %v70
    %100 = vmatprep.subr.mxu0 0.0
    %101 = vmatpush1.msra.mxu0 %v71
    %102 = vmatprep.subr.mxu0 0.0
    %103 = vmatpush1.msra.mxu0 %v72
    %104 = vmatprep.subr.mxu0 0.0
    %105 = vmatpush1.msra.mxu0 %v73
    %106 = vmatprep.subr.mxu0 0.0
    %107 = vmatpush1.msra.mxu0 %v74
    %108 = vmatprep.subr.mxu0 0.0
    %109 = vmatpush1.msra.mxu0 %v75
    %110 = vmatprep.subr.mxu0 0.0
    %111 = vmatpush1.msra.mxu0 %v76
    %112 = vmatprep.subr.mxu0 0.0
    %113 = vmatpush1.msra.mxu0 %v77
    %114 = vmatprep.subr.mxu0 0.0
    %115 = vmatpush1.msra.mxu0 %v78
    %116 = vmatprep.subr.mxu0 0.0
    %117 = vmatpush1.msra.mxu0 %v79
    %118 = vmatprep.subr.mxu0 0.0
    %119 = vmatpush1.msra.mxu0 %v80
    %120 = vmatprep.subr.mxu0 0.0
    %121 = vmatpush1.msra.mxu0 0.0
    %122 = vmatprep.subr.mxu0 0.0
    %123 = vmatpush1.msra.mxu0 0.0
    %124 = vmatprep.subr.mxu0 0.0
    %125 = vmatpush1.msra.mxu0 0.0
    %126 = vmatprep.subr.mxu0 0.0
    %127 = vmatpush1.msra.mxu0 0.0
    %128 = vmatprep.subr.mxu0 0.0
    %129 = vmatpush1.msra.mxu0 0.0
    %130 = vmatprep.subr.mxu0 0.0
    %131 = vmatpush1.msra.mxu0 0.0
    %132 = vmatprep.subr.mxu0 0.0
    %133 = vmatpush1.msra.mxu0 0.0
    %134 = vmatprep.subr.mxu0 0.0
    %135 = vmatpush1.msra.mxu0 0.0
    %136 = vmatprep.subr.mxu0 0.0
    %137 = vmatpush1.msra.mxu0 0.0
    %138 = vmatprep.subr.mxu0 0.0
    %139 = vmatpush1.msra.mxu0 0.0
    %140 = vmatprep.subr.mxu0 0.0
    %141 = vmatpush1.msra.mxu0 0.0
    %142 = vmatprep.subr.mxu0 0.0
    %143 = vmatpush1.msra.mxu0 0.0
    %144 = vmatprep.subr.mxu0 0.0
    %145 = vmatpush1.msra.mxu0 0.0
    %146 = vmatprep.subr.mxu0 0.0
    %147 = vmatpush1.msra.mxu0 0.0
    %148 = vmatprep.subr.mxu0 0.0
    %149 = vmatpush1.msra.mxu0 0.0
    %150 = vmatprep.subr.mxu0 0.0
    %151 = vmatpush1.msra.mxu0 0.0
    %152 = vmatprep.mubr.f32.mxu0 0.0
    %153 = vmatmul.mubr.f32.gmra.mrb[0].mxu0 %v62
    %v154 = vpop.f32.mrb[0].mxu0
    %v155 = vadd.f32 %v86, %v154
    %v156 = vpop.f32.mrb[0].mxu0
    %157 = vmatprep.mubr.f32.mxu0 0.0
    %158 = vmatmul.mubr.f32.gmra.mrb[0].mxu0 %v63
    %v159 = vpop.f32.mrb[0].mxu0
    %v160 = vadd.f32 %v86, %v159
    %v161 = vpop.f32.mrb[0].mxu0
    %162 = vmatprep.mubr.f32.mxu0 0.0
    %163 = vmatmul.mubr.f32.gmra.mrb[0].mxu0 %v64
    %v164 = vpop.f32.mrb[0].mxu0
    %v165 = vadd.f32 %v86, %v164
    %v166 = vpop.f32.mrb[0].mxu0
    %167 = vdwg.mxu0
    %v168 = vmul.f32 %v155, 0.5
    %v169 = vmul.f32 %v160, 0.5
    %v170 = vmul.f32 %v165, 0.5
    %v171 = vmul.f32 %v155, 0.70710677
    %v172 = vmul.f32 %v160, 0.70710677
    %v173 = vmul.f32 %v165, 0.70710677
    %v174 = verf.f32.pop %v171
    %v175 = verf.f32.pop %v172
    %v176 = verf.f32.pop %v173
    %v177 = vadd.f32 %v174, 1.0
    %v178 = vadd.f32 %v175, 1.0
    %v179 = vadd.f32 %v176, 1.0
    %v180 = vmul.f32 %v168, %v177
    %v181 = vmul.f32 %v169, %v178
    %v182 = vmul.f32 %v170, %v179
    %183 = vst [vmem:[#allocation2] sm:$0xff] %v180
    %184 = vst [vmem:[#allocation2 + $0x8] sm:$0xff] %v181
    %185 = vst [vmem:[#allocation2 + $0x10] sm:$0xff] %v182
    %v186 = vld [vmem:[#allocation2] sm:$0xff]
    %v187 = vld [vmem:[#allocation2 + $0x8] sm:$0xff]
    %v188 = vld [vmem:[#allocation2 + $0x10] sm:$0xff]
    %v189 = vld [vmem:[#allocation8] sm:$0xff]
    %v190 = vld [vmem:[#allocation8 + $0x8] sm:$0xff]
    %v191 = vld [vmem:[#allocation8 + $0x10] sm:$0xff]
    %v192 = vld [vmem:[#allocation8 + $0x18] sm:$0xff]
    %v193 = vld [vmem:[#allocation8 + $0x20] sm:$0xff]
    %v194 = vld [vmem:[#allocation8 + $0x28] sm:$0xff]
    %v195 = vld [vmem:[#allocation8 + $0x30] sm:$0xff]
    %v196 = vld [vmem:[#allocation8 + $0x38] sm:$0xff]
    %v197 = vld [vmem:[#allocation8 + $0x40] sm:$0xff]
    %v198 = vld [vmem:[#allocation8 + $0x48] sm:$0xff]
    %v199 = vld [vmem:[#allocation8 + $0x50] sm:$0xff]
    %v200 = vld [vmem:[#allocation8 + $0x58] sm:$0xff]
    %v201 = vld [vmem:[#allocation8 + $0x60] sm:$0xff]
    %v202 = vld [vmem:[#allocation8 + $0x68] sm:$0xff]
    %v203 = vld [vmem:[#allocation8 + $0x70] sm:$0xff]
    %v204 = vld [vmem:[#allocation8 + $0x78] sm:$0xff]
    %v205 = vld [vmem:[%s4] sm:$0x1]
    %v207 = vlaneseq
    %v208 = vshrl.u32 %v207, 7
    %v209 = vsub.s32 0, %v208
    %v210 = vrot.slane %v205, %v209
    %212 = vmatprep.subr.mxu0 0.0
    %213 = vmatpush1.msra.mxu0 %v189
    %214 = vmatprep.subr.mxu0 0.0
    %215 = vmatpush1.msra.mxu0 %v190
    %216 = vmatprep.subr.mxu0 0.0
    %217 = vmatpush1.msra.mxu0 %v191
    %218 = vmatprep.subr.mxu0 0.0
    %219 = vmatpush1.msra.mxu0 %v192
    %220 = vmatprep.subr.mxu0 0.0
    %221 = vmatpush1.msra.mxu0 %v193
    %222 = vmatprep.subr.mxu0 0.0
    %223 = vmatpush1.msra.mxu0 %v194
    %224 = vmatprep.subr.mxu0 0.0
    %225 = vmatpush1.msra.mxu0 %v195
    %226 = vmatprep.subr.mxu0 0.0
    %227 = vmatpush1.msra.mxu0 %v196
    %228 = vmatprep.subr.mxu0 0.0
    %229 = vmatpush1.msra.mxu0 %v197
    %230 = vmatprep.subr.mxu0 0.0
    %231 = vmatpush1.msra.mxu0 %v198
    %232 = vmatprep.subr.mxu0 0.0
    %233 = vmatpush1.msra.mxu0 %v199
    %234 = vmatprep.subr.mxu0 0.0
    %235 = vmatpush1.msra.mxu0 %v200
    %236 = vmatprep.subr.mxu0 0.0
    %237 = vmatpush1.msra.mxu0 %v201
    %238 = vmatprep.subr.mxu0 0.0
    %239 = vmatpush1.msra.mxu0 %v202
    %240 = vmatprep.subr.mxu0 0.0
    %241 = vmatpush1.msra.mxu0 %v203
    %242 = vmatprep.subr.mxu0 0.0
    %243 = vmatpush1.msra.mxu0 %v204
    %244 = vmatprep.subr.mxu0 0.0
    %245 = vmatpush1.msra.mxu0 0.0
    %246 = vmatprep.subr.mxu0 0.0
    %247 = vmatpush1.msra.mxu0 0.0
    %248 = vmatprep.subr.mxu0 0.0
    %249 = vmatpush1.msra.mxu0 0.0
    %250 = vmatprep.subr.mxu0 0.0
    %251 = vmatpush1.msra.mxu0 0.0
    %252 = vmatprep.subr.mxu0 0.0
    %253 = vmatpush1.msra.mxu0 0.0
    %254 = vmatprep.subr.mxu0 0.0
    %255 = vmatpush1.msra.mxu0 0.0
    %256 = vmatprep.subr.mxu0 0.0
    %257 = vmatpush1.msra.mxu0 0.0
    %258 = vmatprep.subr.mxu0 0.0
    %259 = vmatpush1.msra.mxu0 0.0
    %260 = vmatprep.subr.mxu0 0.0
    %261 = vmatpush1.msra.mxu0 0.0
    %262 = vmatprep.subr.mxu0 0.0
    %263 = vmatpush1.msra.mxu0 0.0
    %264 = vmatprep.subr.mxu0 0.0
    %265 = vmatpush1.msra.mxu0 0.0
    %266 = vmatprep.subr.mxu0 0.0
    %267 = vmatpush1.msra.mxu0 0.0
    %268 = vmatprep.subr.mxu0 0.0
    %269 = vmatpush1.msra.mxu0 0.0
    %270 = vmatprep.subr.mxu0 0.0
    %271 = vmatpush1.msra.mxu0 0.0
    %272 = vmatprep.subr.mxu0 0.0
    %273 = vmatpush1.msra.mxu0 0.0
    %274 = vmatprep.subr.mxu0 0.0
    %275 = vmatpush1.msra.mxu0 0.0
    %276 = vmatprep.mubr.f32.mxu0 0.0
    %277 = vmatmul.mubr.f32.gmra.mrb[0].mxu0 %v186
    %v278 = vpop.f32.mrb[0].mxu0
    %v279 = vadd.f32 %v210, %v278
    %v280 = vpop.f32.mrb[0].mxu0
    %281 = vmatprep.mubr.f32.mxu0 0.0
    %282 = vmatmul.mubr.f32.gmra.mrb[0].mxu0 %v187
    %v283 = vpop.f32.mrb[0].mxu0
    %v284 = vadd.f32 %v210, %v283
    %v285 = vpop.f32.mrb[0].mxu0
    %286 = vmatprep.mubr.f32.mxu0 0.0
    %287 = vmatmul.mubr.f32.gmra.mrb[0].mxu0 %v188
    %v288 = vpop.f32.mrb[0].mxu0
    %v289 = vadd.f32 %v210, %v288
    %v290 = vpop.f32.mrb[0].mxu0
    %291 = vdwg.mxu0
    %292 = vst [vmem:[#allocation9] sm:$0xff] %v279
    %293 = vst [vmem:[#allocation9 + $0x8] sm:$0xff] %v284
    %294 = vst [vmem:[#allocation9 + $0x10] sm:$0xff] %v289
    // Predicated region
    $region34: #{tpu_custom_call.1} parent=1 // pred_check
      _
    $region35: #{tpu_custom_call.1} parent=1 // pred_check_branch
      %296 = sbr.rel (0) target = $region37
    $region36: #{tpu_custom_call.1} parent=1 // pred_region
      %s298 = ssub.s32 384, 384
      %299 = vsyncadd [#allocation5], %s298
      %s300 = sshll.u32 [#allocation9], 4
      %s301 = int_to_ptr.vmem [resolvable:$true] %s300
      %306 = dma.vmem_to_hbm [thread:$0]  %s301, 384, %s5, [#allocation5], 128, 128, 8
    $region37: #{tpu_custom_call.1} parent=1 // pred_fallthru
      _
    // Predicated region
    $region38: #{tpu_custom_call.1} parent=1 // pred_check
      _
    $region39: #{tpu_custom_call.1} parent=1 // pred_check_branch
      %308 = sbr.rel (0) target = $region41
    $region40: #{tpu_custom_call.1} parent=1 // pred_region
      %309 = dma.done [#allocation5], 384
    $region41: #{tpu_custom_call.1} parent=1 // pred_fallthru
      _
    %310 = vsyncpa [#allocation4], 1
    %311 = vsyncpa [#allocation7], 1
    %312 = vsyncpa [#allocation5], 1

</llo_original>
